<compile_context>
chip_gen: v7x
topology: tpu7x:2x2x1
jax: 0.10.0
libtpu: 0.0.40
codegen_flags: <defaults>
</compile_context>

<pallas_src>
import functools

import jax
import jax.numpy as jnp
from jax.experimental import pallas as pl
from jax.experimental.pallas import tpu as pltpu


def _analyzer_kernel(xp_ref, w1_ref, b1_ref, w2_ref, b2_ref, w3_ref, b3_ref,
                     o_ref):
    """Packed fused 3-layer MLP on one (bb/8, 8*D) batch tile.

    Packed row g holds original rows 8g..8g+7; block-diagonal weights keep the
    8 sub-rows independent, so this is exactly relu(xW1+b1)->relu(.W2+b2)->
    sigmoid(.w3+b3) per original row.
    """
    xp = xp_ref[...]                                            # (bb/8, 8*D)

    # Layer 1: (bb/8, 8D) @ (8D, 8N) + (1, 8N) -> relu          (MXU + VPU)
    h1 = jnp.dot(xp, w1_ref[...], preferred_element_type=jnp.float32)
    h1 = jnp.maximum(h1 + b1_ref[...], 0.0)

    # Layer 2: (bb/8, 8N) @ (8N, 8N) + (1, 8N) -> relu          (MXU + VPU)
    h2 = jnp.dot(h1, w2_ref[...], preferred_element_type=jnp.float32)
    h2 = jnp.maximum(h2 + b2_ref[...], 0.0)

    # Layer 3 folded into an (8N, 8) matmul: column g picks up sub-row g's
    # dot with w3.  Scalar bias read from SMEM.
    logit = jnp.dot(h2, w3_ref[...], preferred_element_type=jnp.float32)
    logit = logit + b3_ref[0]                                   # (bb/8, 8)

    # Exact sigmoid; exp lands on the EUP.
    o_ref[...] = (1.0 / (1.0 + jnp.exp(-logit))).astype(o_ref.dtype)


def _vmem_limit_bytes():
    """Generation-aware scoped-VMEM limit (leave headroom for DMA buffers)."""
    cap = 128 * 1024 * 1024
    try:
        cap = int(getattr(pltpu.get_tpu_info(), "vmem_capacity_bytes", cap))
    except Exception:
        pass
    # ~48 MiB on 64-MiB v7x parts, ~96 MiB on 128-MiB v5e/v6e parts.
    return int(min(cap - (16 << 20), 96 << 20))


@functools.partial(jax.jit, static_argnames=("block_b",))
def analyzer_forward(x, params, block_b=16384):
    """x: (B, input_shape) float32. Returns (B, 1) float32."""
    w1, b1, w2, b2, w3, b3 = (params["w1"], params["b1"], params["w2"],
                              params["b2"], params["w3"], params["b3"])
    B, D = x.shape
    N = w1.shape[1]

    # Pad the batch to a multiple of 8 only (<= 7 rows) so the lane-dense
    # (B/8, 8*D) view is a free row-major reshape.
    B8 = ((B + 7) // 8) * 8
    if B8 != B:
        x = jnp.pad(x, ((0, B8 - B), (0, 0)))
    Bp = B8 // 8
    Dp = 8 * D
    Np = 8 * N
    xp = x.reshape(Bp, Dp)

    # Pack weights block-diagonally so 8 original rows ride in one packed row.
    eye8 = jnp.eye(8, dtype=jnp.float32)
    w1p = jnp.einsum("gh,io->giho", eye8, w1).reshape(Dp, Np)
    w2p = jnp.einsum("gh,io->giho", eye8, w2).reshape(Np, Np)
    b1p = jnp.tile(b1.reshape(1, N), (1, 8))
    b2p = jnp.tile(b2.reshape(1, N), (1, 8))
    w3p = jnp.einsum("gh,i->gih", eye8, w3.reshape(N)).reshape(Np, 8)
    b3s = b3.reshape(1)

    # Batch tile: multiple of 64 original rows (=> 8 f32 sublanes packed),
    # clamped to the batch; prefer >= 2 grid steps so v7x megacore can split
    # the batch across both TensorCores.
    bb = max(64, min(block_b, B8))
    bb = ((bb + 63) // 64) * 64
    if B8 > 128:
        half = ((-(-B8 // 2)) + 63) // 64 * 64
        bb = min(bb, half)
    bbp = bb // 8
    grid_b = pl.cdiv(Bp, bbp)  # ragged tail handled as a Pallas edge block

    in_specs = [
        pl.BlockSpec((bbp, Dp), lambda i: (i, 0)),           # packed x tiles
        pl.BlockSpec((Dp, Np), lambda i: (0, 0)),            # W1' (resident)
        pl.BlockSpec((1, Np), lambda i: (0, 0)),             # b1 tiled
        pl.BlockSpec((Np, Np), lambda i: (0, 0)),            # W2'
        pl.BlockSpec((1, Np), lambda i: (0, 0)),             # b2 tiled
        pl.BlockSpec((Np, 8), lambda i: (0, 0)),             # W3 folded
        pl.BlockSpec(memory_space=pltpu.MemorySpace.SMEM),   # b3 scalar
    ]
    out_spec = pl.BlockSpec((bbp, 8), lambda i: (i, 0))      # packed output

    cost = pl.CostEstimate(
        flops=2 * B8 * (D * N + N * N + N),
        transcendentals=B8,
        bytes_accessed=4 * (B8 * D + B8 + Dp * Np + Np * Np + Np * 8 + 2 * Np + 1),
    )

    out = pl.pallas_call(
        _analyzer_kernel,
        out_shape=jax.ShapeDtypeStruct((Bp, 8), jnp.float32),
        grid_spec=pltpu.PrefetchScalarGridSpec(
            num_scalar_prefetch=0,
            grid=(grid_b,),
            in_specs=in_specs,
            out_specs=out_spec,
        ),
        compiler_params=pltpu.CompilerParams(
            dimension_semantics=("parallel",),
            vmem_limit_bytes=_vmem_limit_bytes(),
        ),
        cost_estimate=cost,
    )(xp, w1p, b1p, w2p, b2p, w3p, b3s)

    return out.reshape(B8, 1)[:B]


def init_params(key, input_shape, neurons):
    """Deterministic init mimicking PyTorch Linear (uniform +-1/sqrt(fan_in)).

    w1/w2 stored as (in, out); w3 as a (1, N) row; b3 as a (1,) scalar.
    """
    k1, k2, k3, k4, k5, k6 = jax.random.split(key, 6)

    def u(k, shape, fan_in):
        bound = 1.0 / jnp.sqrt(jnp.float32(fan_in))
        return jax.random.uniform(k, shape, jnp.float32, -bound, bound)

    return {
        "w1": u(k1, (input_shape, neurons), input_shape),
        "b1": u(k2, (1, neurons), input_shape),
        "w2": u(k3, (neurons, neurons), neurons),
        "b2": u(k4, (1, neurons), neurons),
        "w3": u(k5, (1, neurons), neurons),
        "b3": u(k6, (1,), neurons),
    }


def analyzer_reference(x, params):
    """Pure-JAX reference matching the PyTorch forward."""
    h = jnp.maximum(x @ params["w1"] + params["b1"], 0.0)
    h = jnp.maximum(h @ params["w2"] + params["b2"], 0.0)
    logits = h @ params["w3"].reshape(-1, 1) + params["b3"]
    return jax.nn.sigmoid(logits)


if __name__ == "__main__":
    key = jax.random.PRNGKey(0)
    k_param, k_x = jax.random.split(key)

    input_shape = 16
    neurons = 32
    params = init_params(k_param, input_shape, neurons)

    # Ragged batch: exercises multi-step "parallel" grid + partial edge block.
    x = jax.random.normal(k_x, (1000, input_shape), dtype=jnp.float32)
    out = jax.block_until_ready(analyzer_forward(x, params, block_b=256))
    ref = analyzer_reference(x, params)
    assert out.shape == (1000, 1), out.shape
    err = jnp.max(jnp.abs(out - ref))
    assert jnp.allclose(out, ref, atol=1e-3, rtol=1e-3), f"max abs err = {err}"

    # Tiny, non-multiple-of-8 batch: pad-to-8 path, single partial block.
    x_small = jax.random.normal(jax.random.PRNGKey(1), (10, input_shape),
                                dtype=jnp.float32)
    out_small = jax.block_until_ready(analyzer_forward(x_small, params))
    ref_small = analyzer_reference(x_small, params)
    assert out_small.shape == (10, 1), out_small.shape
    err_s = jnp.max(jnp.abs(out_small - ref_small))
    assert jnp.allclose(out_small, ref_small, atol=1e-3, rtol=1e-3), (
        f"max abs err = {err_s}")

    print("KERNEL_OK")
</pallas_src>

<mosaic_0001>
module attributes {stable_mosaic.version = 11 : i64} {
  func.func @_analyzer_kernel(%arg0: i32, %arg1: memref<32x128xf32, #tpu.memory_space<vmem>>, %arg2: memref<128x256xf32, #tpu.memory_space<vmem>>, %arg3: memref<1x256xf32, #tpu.memory_space<vmem>>, %arg4: memref<256x256xf32, #tpu.memory_space<vmem>>, %arg5: memref<1x256xf32, #tpu.memory_space<vmem>>, %arg6: memref<256x8xf32, #tpu.memory_space<vmem>>, %arg7: memref<1xf32, #tpu.memory_space<smem>>, %arg8: memref<32x8xf32, #tpu.memory_space<vmem>>) attributes {dimension_semantics = [#tpu.dimension_semantics<parallel>], iteration_bounds = array<i64: 4>, scalar_prefetch = 0 : i64, scratch_operands = 0 : i64, tpu.core_type = #tpu.core_type<tc>, window_params = [{transform_indices = @transform_0, window_bounds = array<i64: 32, 128>}, {pipeline_mode = #tpu.pipeline_mode<synchronous>, transform_indices = @transform_1, window_bounds = array<i64: 128, 256>}, {pipeline_mode = #tpu.pipeline_mode<synchronous>, transform_indices = @transform_2, window_bounds = array<i64: 1, 256>}, {pipeline_mode = #tpu.pipeline_mode<synchronous>, transform_indices = @transform_3, window_bounds = array<i64: 256, 256>}, {pipeline_mode = #tpu.pipeline_mode<synchronous>, transform_indices = @transform_4, window_bounds = array<i64: 1, 256>}, {pipeline_mode = #tpu.pipeline_mode<synchronous>, transform_indices = @transform_5, window_bounds = array<i64: 256, 8>}, {transform_indices = @transform_6, window_bounds = array<i64: 1>}, {transform_indices = @transform_7, window_bounds = array<i64: 32, 8>}]} {
    %c0 = arith.constant 0 : index
    %c0_0 = arith.constant 0 : index
    %0 = vector.load %arg1[%c0, %c0_0] : memref<32x128xf32, #tpu.memory_space<vmem>>, vector<32x128xf32>
    %c0_1 = arith.constant 0 : index
    %c0_2 = arith.constant 0 : index
    %1 = vector.load %arg2[%c0_1, %c0_2] : memref<128x256xf32, #tpu.memory_space<vmem>>, vector<128x256xf32>
    %cst = arith.constant dense<0.000000e+00> : vector<32x256xf32>
    %2 = tpu.matmul %0, %1, %cst {dimension_numbers = #tpu.dot_dimension_numbers<[1], [0], [0], [1], [0, 0, 1, 1], [], []>} : vector<32x128xf32>, vector<128x256xf32>, vector<32x256xf32> -> vector<32x256xf32>
    %c0_3 = arith.constant 0 : index
    %c0_4 = arith.constant 0 : index
    %3 = vector.load %arg3[%c0_3, %c0_4] : memref<1x256xf32, #tpu.memory_space<vmem>>, vector<1x256xf32>
    %4 = vector.broadcast %3 : vector<1x256xf32> to vector<32x256xf32>
    %5 = arith.addf %2, %4 : vector<32x256xf32>
    %cst_5 = arith.constant 0.000000e+00 : f32
    %6 = vector.broadcast %cst_5 : f32 to vector<32x256xf32>
    %7 = arith.maximumf %5, %6 : vector<32x256xf32>
    %c0_6 = arith.constant 0 : index
    %c0_7 = arith.constant 0 : index
    %8 = vector.load %arg4[%c0_6, %c0_7] : memref<256x256xf32, #tpu.memory_space<vmem>>, vector<256x256xf32>
    %cst_8 = arith.constant dense<0.000000e+00> : vector<32x256xf32>
    %9 = tpu.matmul %7, %8, %cst_8 {dimension_numbers = #tpu.dot_dimension_numbers<[1], [0], [0], [1], [0, 0, 1, 1], [], []>} : vector<32x256xf32>, vector<256x256xf32>, vector<32x256xf32> -> vector<32x256xf32>
    %c0_9 = arith.constant 0 : index
    %c0_10 = arith.constant 0 : index
    %10 = vector.load %arg5[%c0_9, %c0_10] : memref<1x256xf32, #tpu.memory_space<vmem>>, vector<1x256xf32>
    %11 = vector.broadcast %10 : vector<1x256xf32> to vector<32x256xf32>
    %12 = arith.addf %9, %11 : vector<32x256xf32>
    %cst_11 = arith.constant 0.000000e+00 : f32
    %13 = vector.broadcast %cst_11 : f32 to vector<32x256xf32>
    %14 = arith.maximumf %12, %13 : vector<32x256xf32>
    %c0_12 = arith.constant 0 : index
    %c0_13 = arith.constant 0 : index
    %15 = vector.load %arg6[%c0_12, %c0_13] : memref<256x8xf32, #tpu.memory_space<vmem>>, vector<256x8xf32>
    %cst_14 = arith.constant dense<0.000000e+00> : vector<32x8xf32>
    %16 = tpu.matmul %14, %15, %cst_14 {dimension_numbers = #tpu.dot_dimension_numbers<[1], [0], [0], [1], [0, 0, 1, 1], [], []>} : vector<32x256xf32>, vector<256x8xf32>, vector<32x8xf32> -> vector<32x8xf32>
    %c0_15 = arith.constant 0 : index
    %17 = memref.load %arg7[%c0_15] : memref<1xf32, #tpu.memory_space<smem>>
    %18 = vector.broadcast %17 : f32 to vector<32x8xf32>
    %19 = arith.addf %16, %18 : vector<32x8xf32>
    %cst_16 = arith.constant 0.000000e+00 : f32
    %20 = vector.broadcast %cst_16 : f32 to vector<32x8xf32>
    %21 = arith.subf %20, %19 : vector<32x8xf32>
    %22 = math.exp %21 : vector<32x8xf32>
    %cst_17 = arith.constant 1.000000e+00 : f32
    %23 = vector.broadcast %cst_17 : f32 to vector<32x8xf32>
    %24 = arith.addf %23, %22 : vector<32x8xf32>
    %cst_18 = arith.constant 1.000000e+00 : f32
    %25 = vector.broadcast %cst_18 : f32 to vector<32x8xf32>
    %26 = arith.divf %25, %24 : vector<32x8xf32>
    %c0_19 = arith.constant 0 : index
    %c0_20 = arith.constant 0 : index
    %27 = vector.load %arg8[%c0_19, %c0_20] : memref<32x8xf32, #tpu.memory_space<vmem>>, vector<32x8xf32>
    tpu.vector_store %arg8[%c0_19, %c0_20], %26 {strides = array<i32>} : memref<32x8xf32, #tpu.memory_space<vmem>>, vector<32x8xf32>,
    return
  }
  func.func @transform_0(%arg0: i32) -> (i32, i32) {
    %c0_i32 = arith.constant 0 : i32
    %c0_i32_0 = arith.constant 0 : i32
    return %arg0, %c0_i32 : i32, i32
  }
  func.func @transform_1(%arg0: i32) -> (i32, i32) {
    %c0_i32 = arith.constant 0 : i32
    %c0_i32_0 = arith.constant 0 : i32
    %c0_i32_1 = arith.constant 0 : i32
    return %c0_i32, %c0_i32_0 : i32, i32
  }
  func.func @transform_2(%arg0: i32) -> (i32, i32) {
    %c0_i32 = arith.constant 0 : i32
    %c0_i32_0 = arith.constant 0 : i32
    %c0_i32_1 = arith.constant 0 : i32
    return %c0_i32, %c0_i32_0 : i32, i32
  }
  func.func @transform_3(%arg0: i32) -> (i32, i32) {
    %c0_i32 = arith.constant 0 : i32
    %c0_i32_0 = arith.constant 0 : i32
    %c0_i32_1 = arith.constant 0 : i32
    return %c0_i32, %c0_i32_0 : i32, i32
  }
  func.func @transform_4(%arg0: i32) -> (i32, i32) {
    %c0_i32 = arith.constant 0 : i32
    %c0_i32_0 = arith.constant 0 : i32
    %c0_i32_1 = arith.constant 0 : i32
    return %c0_i32, %c0_i32_0 : i32, i32
  }
  func.func @transform_5(%arg0: i32) -> (i32, i32) {
    %c0_i32 = arith.constant 0 : i32
    %c0_i32_0 = arith.constant 0 : i32
    %c0_i32_1 = arith.constant 0 : i32
    return %c0_i32, %c0_i32_0 : i32, i32
  }
  func.func @transform_6(%arg0: i32) -> i32 {
    %c0_i32 = arith.constant 0 : i32
    %c0_i32_0 = arith.constant 0 : i32
    return %c0_i32 : i32
  }
  func.func @transform_7(%arg0: i32) -> (i32, i32) {
    %c0_i32 = arith.constant 0 : i32
    %c0_i32_0 = arith.constant 0 : i32
    return %arg0, %c0_i32 : i32, i32
  }
}

</mosaic_0001>

<llo_original>
// kernel: analyzer_forward.1
$region0: #{analyzer_forward.1}
  #allocation0 [shape = 'u32[]', space=smem, size = 0x4, offset = 0x4, fixed_abs, tag = 'smem constant byte address 0x4 - core index']
  #allocation1 [shape = 'u32[144,128]{1,0:T(1,128)}', space=vmem, size = 0x12000, scoped, tag = 'internal scratch']
  #allocation2 [shape = 'f32[1]{0:T(128)S(6)}', space=smem, size = 0x200, scoped, tag = 'scoped memory for analyzer_forward.1']
  %s0 = inlined_call_operand.hbm [shape: f32[125,128], index: 0, kind: input, shape index: {}]
  %s1 = inlined_call_operand.hbm [shape: f32[128,256], index: 1, kind: input, shape index: {}]
  %s2 = inlined_call_operand.hbm [shape: f32[1,256], index: 2, kind: input, shape index: {}]
  %s3 = inlined_call_operand.hbm [shape: f32[256,256], index: 3, kind: input, shape index: {}]
  %s4 = inlined_call_operand.hbm [shape: f32[1,256], index: 4, kind: input, shape index: {}]
  %s5 = inlined_call_operand.hbm [shape: f32[256,8], index: 5, kind: input, shape index: {}]
  %s6 = inlined_call_operand.<no memory space> [shape: f32[1], index: 6, kind: input, shape index: {}]
  %s7 = inlined_call_operand.hbm [shape: f32[125,8], index: 7, kind: output, shape index: {}]
  %s8 = sld [smem:[#allocation0]]
  $region85: #{analyzer_forward.1} parent=0
    _
  %s10 = ssub.s32 1, %s8
  %s11 = scalar_select 0, %s10, %s8
  %12 = sst [smem:[#allocation2]] %s6
  $region1: #{analyzer_forward.1} parent=0
    #allocation3 [shape = 'u8[32768]{0}', space=vmem, size = 0x8000, scoped, tag = 'input window, operand 0']
    #allocation4 [shape = 's32[2]{0}', space=sflag, size = 0x8, scoped, tag = 'scoped memory for analyzer_forward.1']
    #allocation5 [shape = 's32[2]{0}', space=sflag, size = 0x8, scoped, tag = 'scoped memory for analyzer_forward.1']
    #allocation6 [shape = 'u8[131072]{0}', space=vmem, size = 0x20000, scoped, tag = 'input window, operand 1, single buffered']
    #allocation7 [shape = 's32[1]{0}', space=sflag, size = 0x4, scoped, tag = 'scoped memory for analyzer_forward.1']
    #allocation8 [shape = 'u8[1024]{0}', space=vmem, size = 0x400, scoped, tag = 'input window, operand 2, single buffered']
    #allocation9 [shape = 'u8[262144]{0}', space=vmem, size = 0x40000, scoped, tag = 'input window, operand 3, single buffered']
    #allocation10 [shape = 's32[1]{0}', space=sflag, size = 0x4, scoped, tag = 'scoped memory for analyzer_forward.1']
    #allocation11 [shape = 'u8[1024]{0}', space=vmem, size = 0x400, scoped, tag = 'input window, operand 4, single buffered']
    #allocation12 [shape = 'u8[131072]{0}', space=vmem, size = 0x20000, scoped, tag = 'input window, operand 5, single buffered']
    #allocation13 [shape = 's32[1]{0}', space=sflag, size = 0x4, scoped, tag = 'scoped memory for analyzer_forward.1']
    #allocation14 [shape = 'u8[32768]{0}', space=vmem, size = 0x8000, scoped, tag = 'output window, operand 0']
    %13 = vsyncpa [#allocation4], 0
    %s14 = scalar_lea.sflag [#allocation4], 1
    %15 = vsyncpa %s14, 0
    %16 = vsyncpa [#allocation7], 0
    %17 = vsyncpa [#allocation10], 0
    %18 = vsyncpa [#allocation13], 0
    %19 = vsyncpa [#allocation5], 0
    %s20 = scalar_lea.sflag [#allocation5], 1
    %21 = vsyncpa %s20, 0
    loop: start=0, step=1, limit=6
    $region2: #{analyzer_forward.1} parent=1 // loop_pre_header
      _
    $region3: #{analyzer_forward.1} parent=1 // loop_header
      %s23 = sphi 0, %s27
      %p24 = scmp.ge.s32.totalorder %s23, 6
      %s33 = sphi 0, %s35
      %s36 = sphi 0, %s33
      %s37 = sphi 0, %s36
      %s53 = sphi 0, %s37
      %s57 = sphi 0, %s57
      %s59 = sphi 0, %s57
      %s60 = sphi 0, %s59
      %s74 = sphi 0, %s60
      %s78 = sphi 0, %s78
      %s80 = sphi 0, %s78
      %s81 = sphi 0, %s80
      %s95 = sphi 0, %s81
      %s99 = sphi 0, %s99
      %s101 = sphi 0, %s99
      %s102 = sphi 0, %s101
      %s116 = sphi 0, %s102
      %s120 = sphi 0, %s120
      %s122 = sphi 0, %s120
      %s123 = sphi 0, %s122
      %s137 = sphi 0, %s123
      %s141 = sphi 0, %s141
      %s143 = sphi 0, %s141
      %s144 = sphi 0, %s143
      %s158 = sphi 0, %s144
      %s162 = sphi 0, %s162
      %s164 = sphi 0, %s162
      %s165 = sphi 0, %s164
      %s179 = sphi 0, %s165
      %s185 = sphi 0, %s187
      %s188 = sphi 0, %s185
      %s189 = sphi 0, %s188
      %s205 = sphi 0, %s189
    $region4: #{analyzer_forward.1} parent=1 // loop_header_branch
      %26 = sbr.rel (%p24) target = $region8
    $region5: #{analyzer_forward.1} parent=1 // loop_body
      %s28 = ssub.s32 %s23, 1
      %s29 = ssub.s32 %s23, 2
      %s30 = sadd.s32 %s23, 1
      %s31 = ssub.s32 %s23, %s30
      %p32 = scmp.eq.s32.totalorder %s31, 0
      %s34 = sadd.s32 %s33, 1
      %s35 = scalar_select %p32, %s33, %s34
      %p38 = pneg %p32
      %p39 = scmp.eq.s32.totalorder %s23, 3
      %p40 = por %p38, %p39
      %p41 = scmp.ne.s32.totalorder %s33, %s36
      %p42 = scmp.eq.s32.totalorder %s23, 0
      %p43 = por %p41, %p42
      %p44 = scmp.ne.s32.totalorder %s33, %s36
      %p45 = scmp.eq.s32.totalorder %s28, 3
      %p46 = por %p44, %p45
      %p47 = scmp.ne.s32.totalorder %s36, %s37
      %p48 = scmp.eq.s32.totalorder %s28, 0
      %p49 = por %p47, %p48
      %p50 = scmp.ne.s32.totalorder %s36, %s37
      %p51 = scmp.eq.s32.totalorder %s29, 3
      %p52 = por %p50, %p51
      %p54 = scmp.ne.s32.totalorder %s37, %s53
      %p55 = scmp.eq.s32.totalorder %s29, 0
      %p56 = por %p54, %p55
      %s58 = sadd.s32 %s57, 1
      %p61 = scmp.eq.s32.totalorder %s23, 3
      %p62 = scmp.ne.s32.totalorder %s57, %s59
      %p63 = scmp.eq.s32.totalorder %s23, 0
      %p64 = por %p62, %p63
      %p65 = scmp.ne.s32.totalorder %s57, %s59
      %p66 = scmp.eq.s32.totalorder %s28, 3
      %p67 = por %p65, %p66
      %p68 = scmp.ne.s32.totalorder %s59, %s60
      %p69 = scmp.eq.s32.totalorder %s28, 0
      %p70 = por %p68, %p69
      %p71 = scmp.ne.s32.totalorder %s59, %s60
      %p72 = scmp.eq.s32.totalorder %s29, 3
      %p73 = por %p71, %p72
      %p75 = scmp.ne.s32.totalorder %s60, %s74
      %p76 = scmp.eq.s32.totalorder %s29, 0
      %p77 = por %p75, %p76
      %s79 = sadd.s32 %s78, 1
      %p82 = scmp.eq.s32.totalorder %s23, 3
      %p83 = scmp.ne.s32.totalorder %s78, %s80
      %p84 = scmp.eq.s32.totalorder %s23, 0
      %p85 = por %p83, %p84
      %p86 = scmp.ne.s32.totalorder %s78, %s80
      %p87 = scmp.eq.s32.totalorder %s28, 3
      %p88 = por %p86, %p87
      %p89 = scmp.ne.s32.totalorder %s80, %s81
      %p90 = scmp.eq.s32.totalorder %s28, 0
      %p91 = por %p89, %p90
      %p92 = scmp.ne.s32.totalorder %s80, %s81
      %p93 = scmp.eq.s32.totalorder %s29, 3
      %p94 = por %p92, %p93
      %p96 = scmp.ne.s32.totalorder %s81, %s95
      %p97 = scmp.eq.s32.totalorder %s29, 0
      %p98 = por %p96, %p97
      %s100 = sadd.s32 %s99, 1
      %p103 = scmp.eq.s32.totalorder %s23, 3
      %p104 = scmp.ne.s32.totalorder %s99, %s101
      %p105 = scmp.eq.s32.totalorder %s23, 0
      %p106 = por %p104, %p105
      %p107 = scmp.ne.s32.totalorder %s99, %s101
      %p108 = scmp.eq.s32.totalorder %s28, 3
      %p109 = por %p107, %p108
      %p110 = scmp.ne.s32.totalorder %s101, %s102
      %p111 = scmp.eq.s32.totalorder %s28, 0
      %p112 = por %p110, %p111
      %p113 = scmp.ne.s32.totalorder %s101, %s102
      %p114 = scmp.eq.s32.totalorder %s29, 3
      %p115 = por %p113, %p114
      %p117 = scmp.ne.s32.totalorder %s102, %s116
      %p118 = scmp.eq.s32.totalorder %s29, 0
      %p119 = por %p117, %p118
      %s121 = sadd.s32 %s120, 1
      %p124 = scmp.eq.s32.totalorder %s23, 3
      %p125 = scmp.ne.s32.totalorder %s120, %s122
      %p126 = scmp.eq.s32.totalorder %s23, 0
      %p127 = por %p125, %p126
      %p128 = scmp.ne.s32.totalorder %s120, %s122
      %p129 = scmp.eq.s32.totalorder %s28, 3
      %p130 = por %p128, %p129
      %p131 = scmp.ne.s32.totalorder %s122, %s123
      %p132 = scmp.eq.s32.totalorder %s28, 0
      %p133 = por %p131, %p132
      %p134 = scmp.ne.s32.totalorder %s122, %s123
      %p135 = scmp.eq.s32.totalorder %s29, 3
      %p136 = por %p134, %p135
      %p138 = scmp.ne.s32.totalorder %s123, %s137
      %p139 = scmp.eq.s32.totalorder %s29, 0
      %p140 = por %p138, %p139
      %s142 = sadd.s32 %s141, 1
      %p145 = scmp.eq.s32.totalorder %s23, 3
      %p146 = scmp.ne.s32.totalorder %s141, %s143
      %p147 = scmp.eq.s32.totalorder %s23, 0
      %p148 = por %p146, %p147
      %p149 = scmp.ne.s32.totalorder %s141, %s143
      %p150 = scmp.eq.s32.totalorder %s28, 3
      %p151 = por %p149, %p150
      %p152 = scmp.ne.s32.totalorder %s143, %s144
      %p153 = scmp.eq.s32.totalorder %s28, 0
      %p154 = por %p152, %p153
      %p155 = scmp.ne.s32.totalorder %s143, %s144
      %p156 = scmp.eq.s32.totalorder %s29, 3
      %p157 = por %p155, %p156
      %p159 = scmp.ne.s32.totalorder %s144, %s158
      %p160 = scmp.eq.s32.totalorder %s29, 0
      %p161 = por %p159, %p160
      %s163 = sadd.s32 %s162, 1
      %p166 = scmp.eq.s32.totalorder %s23, 3
      %p167 = scmp.ne.s32.totalorder %s162, %s164
      %p168 = scmp.eq.s32.totalorder %s23, 0
      %p169 = por %p167, %p168
      %p170 = scmp.ne.s32.totalorder %s162, %s164
      %p171 = scmp.eq.s32.totalorder %s28, 3
      %p172 = por %p170, %p171
      %p173 = scmp.ne.s32.totalorder %s164, %s165
      %p174 = scmp.eq.s32.totalorder %s28, 0
      %p175 = por %p173, %p174
      %p176 = scmp.ne.s32.totalorder %s164, %s165
      %p177 = scmp.eq.s32.totalorder %s29, 3
      %p178 = por %p176, %p177
      %p180 = scmp.ne.s32.totalorder %s165, %s179
      %p181 = scmp.eq.s32.totalorder %s29, 0
      %p182 = por %p180, %p181
      %s183 = ssub.s32 %s23, %s30
      %p184 = scmp.eq.s32.totalorder %s183, 0
      %s186 = sadd.s32 %s185, 1
      %s187 = scalar_select %p184, %s185, %s186
      %p190 = pneg %p184
      %p191 = scmp.eq.s32.totalorder %s23, 3
      %p192 = por %p190, %p191
      %p193 = scmp.ne.s32.totalorder %s185, %s188
      %p194 = scmp.eq.s32.totalorder %s23, 0
      %p195 = por %p193, %p194
      %p196 = scmp.ne.s32.totalorder %s185, %s188
      %p197 = scmp.eq.s32.totalorder %s28, 3
      %p198 = por %p196, %p197
      %p199 = scmp.ne.s32.totalorder %s188, %s189
      %p200 = scmp.eq.s32.totalorder %s28, 0
      %p201 = por %p199, %p200
      %p202 = scmp.ne.s32.totalorder %s188, %s189
      %p203 = scmp.eq.s32.totalorder %s29, 3
      %p204 = por %p202, %p203
      %p206 = scmp.ne.s32.totalorder %s189, %s205
      %p207 = scmp.eq.s32.totalorder %s29, 0
      %p208 = por %p206, %p207
      %p209 = scmp.le.s32.totalorder 1, %s23
      %p210 = scmp.lt.s32.totalorder %s23, 5
      %p211 = pnand %p209, %p210
      %p212 = pneg %p211
      // Predicated region
      $region9: #{analyzer_forward.1} parent=5 // pred_check
        _
      $region10: #{analyzer_forward.1} parent=5 // pred_check_branch
        %214 = sbr.rel (%p211) target = $region12
      $region11: #{analyzer_forward.1} parent=5 // pred_region
        %s215 = ssub.s32 %s23, 1
        // Predicated region
        $region13: #{analyzer_forward.1} parent=11 // pred_check
          %p216 = pneg %p70
        $region14: #{analyzer_forward.1} parent=11 // pred_check_branch
          %218 = sbr.rel (%p216) target = $region16
        $region15: #{analyzer_forward.1} parent=11 // pred_region
          %s220 = ssub.s32 4096, 4096
          %221 = vsyncadd [#allocation7], %s220
          %s222 = sshll.u32 [#allocation6], 4
          %s223 = int_to_ptr.vmem [resolvable:$true] %s222
          %228 = dma.hbm_to_vmem [thread:$0]  %s1, 4096, %s223, [#allocation7], 256, 256, 16
        $region16: #{analyzer_forward.1} parent=11 // pred_fallthru
          _
        // Predicated region
        $region17: #{analyzer_forward.1} parent=11 // pred_check
          %p229 = pneg %p91
        $region18: #{analyzer_forward.1} parent=11 // pred_check_branch
          %231 = sbr.rel (%p229) target = $region20
        $region19: #{analyzer_forward.1} parent=11 // pred_region
          %s233 = ssub.s32 32, 32
          %234 = vsyncadd [#allocation7], %s233
          %s236 = sshll.u32 [#allocation8], 4
          %s237 = int_to_ptr.vmem [resolvable:$true] %s236
          %239 = dma.hbm_to_vmem [thread:$0]  %s2, 32, %s237, [#allocation7]
        $region20: #{analyzer_forward.1} parent=11 // pred_fallthru
          _
        // Predicated region
        $region21: #{analyzer_forward.1} parent=11 // pred_check
          %p240 = pneg %p112
        $region22: #{analyzer_forward.1} parent=11 // pred_check_branch
          %242 = sbr.rel (%p240) target = $region24
        $region23: #{analyzer_forward.1} parent=11 // pred_region
          %s244 = ssub.s32 8192, 8192
          %245 = vsyncadd [#allocation10], %s244
          %s246 = sshll.u32 [#allocation9], 4
          %s247 = int_to_ptr.vmem [resolvable:$true] %s246
          %252 = dma.hbm_to_vmem [thread:$0]  %s3, 8192, %s247, [#allocation10], 256, 256, 16
        $region24: #{analyzer_forward.1} parent=11 // pred_fallthru
          _
        // Predicated region
        $region25: #{analyzer_forward.1} parent=11 // pred_check
          %p253 = pneg %p133
        $region26: #{analyzer_forward.1} parent=11 // pred_check_branch
          %255 = sbr.rel (%p253) target = $region28
        $region27: #{analyzer_forward.1} parent=11 // pred_region
          %s257 = ssub.s32 32, 32
          %258 = vsyncadd [#allocation10], %s257
          %s260 = sshll.u32 [#allocation11], 4
          %s261 = int_to_ptr.vmem [resolvable:$true] %s260
          %263 = dma.hbm_to_vmem [thread:$0]  %s4, 32, %s261, [#allocation10]
        $region28: #{analyzer_forward.1} parent=11 // pred_fallthru
          _
        // Predicated region
        $region29: #{analyzer_forward.1} parent=11 // pred_check
          %p264 = pneg %p154
        $region30: #{analyzer_forward.1} parent=11 // pred_check_branch
          %266 = sbr.rel (%p264) target = $region32
        $region31: #{analyzer_forward.1} parent=11 // pred_region
          %s268 = ssub.s32 4096, 4096
          %269 = vsyncadd [#allocation13], %s268
          %s270 = sshll.u32 [#allocation12], 4
          %s271 = int_to_ptr.vmem [resolvable:$true] %s270
          %276 = dma.hbm_to_vmem [thread:$0]  %s5, 4096, %s271, [#allocation13], 128, 128, 8
        $region32: #{analyzer_forward.1} parent=11 // pred_fallthru
          _
        // Predicated region
        $region33: #{analyzer_forward.1} parent=11 // pred_check
          %p277 = pneg %p175
        $region34: #{analyzer_forward.1} parent=11 // pred_check_branch
          %279 = sbr.rel (%p277) target = $region36
        $region35: #{analyzer_forward.1} parent=11 // pred_region
          _
        $region36: #{analyzer_forward.1} parent=11 // pred_fallthru
          _
      $region12: #{analyzer_forward.1} parent=5 // pred_fallthru
        _
      %p280 = scmp.lt.s32.totalorder %s23, 4
      // Predicated region
      $region37: #{analyzer_forward.1} parent=5 // pred_check
        %p281 = pneg %p280
      $region38: #{analyzer_forward.1} parent=5 // pred_check_branch
        %283 = sbr.rel (%p281) target = $region40
      $region39: #{analyzer_forward.1} parent=5 // pred_region
        // Predicated region
        $region41: #{analyzer_forward.1} parent=39 // pred_check
          %p284 = pneg %p43
        $region42: #{analyzer_forward.1} parent=39 // pred_check_branch
          %286 = sbr.rel (%p284) target = $region44
        $region43: #{analyzer_forward.1} parent=39 // pred_region
          %s287 = sand.u32 %s33, 1
          %s288 = scalar_lea.sflag [#allocation4], %s287
          %s289 = sand.u32 %s33, 1
          %s290 = smul.addr %s289, 32
          %s291 = scalar_lea.vmem [#allocation3], %s290
          %s292 = smul.u32 4, %s23
          %s294 = ssub.s32 512, 512
          %295 = vsyncadd %s288, %s294
          %s296 = smul.addr %s292, 128
          %s297 = scalar_lea.hbm %s0, %s296
          %s298 = sshll.u32 %s291, 4
          %s299 = int_to_ptr.vmem [resolvable:$true] %s298
          %304 = dma.hbm_to_vmem [thread:$0]  %s297, 512, %s299, %s288, 128, 128, 8
        $region44: #{analyzer_forward.1} parent=39 // pred_fallthru
          _
      $region40: #{analyzer_forward.1} parent=5 // pred_fallthru
        _
      %p305 = scmp.le.s32.totalorder 1, %s23
      %p306 = scmp.lt.s32.totalorder %s23, 5
      %p307 = pnand %p305, %p306
      %p308 = pneg %p307
      // Predicated region
      $region45: #{analyzer_forward.1} parent=5 // pred_check
        _
      $region46: #{analyzer_forward.1} parent=5 // pred_check_branch
        %310 = sbr.rel (%p307) target = $region48
      $region47: #{analyzer_forward.1} parent=5 // pred_region
        %s311 = ssub.s32 %s23, 1
        %s312 = sand.u32 %s36, 1
        %s313 = scalar_lea.sflag [#allocation4], %s312
        %s314 = sand.u32 %s36, 1
        %s315 = smul.addr %s314, 32
        %s316 = scalar_lea.vmem [#allocation3], %s315
        // Predicated region
        $region49: #{analyzer_forward.1} parent=47 // pred_check
          %p317 = pneg %p49
        $region50: #{analyzer_forward.1} parent=47 // pred_check_branch
          %319 = sbr.rel (%p317) target = $region52
        $region51: #{analyzer_forward.1} parent=47 // pred_region
          %320 = dma.done %s313, 512
        $region52: #{analyzer_forward.1} parent=47 // pred_fallthru
          _
        // Predicated region
        $region53: #{analyzer_forward.1} parent=47 // pred_check
          %p321 = pneg %p70
        $region54: #{analyzer_forward.1} parent=47 // pred_check_branch
          %323 = sbr.rel (%p321) target = $region56
        $region55: #{analyzer_forward.1} parent=47 // pred_region
          %324 = dma.done [#allocation7], 4096
        $region56: #{analyzer_forward.1} parent=47 // pred_fallthru
          _
        // Predicated region
        $region57: #{analyzer_forward.1} parent=47 // pred_check
          %p325 = pneg %p91
        $region58: #{analyzer_forward.1} parent=47 // pred_check_branch
          %327 = sbr.rel (%p325) target = $region60
        $region59: #{analyzer_forward.1} parent=47 // pred_region
          %328 = dma.done [#allocation7], 32
        $region60: #{analyzer_forward.1} parent=47 // pred_fallthru
          _
        // Predicated region
        $region61: #{analyzer_forward.1} parent=47 // pred_check
          %p329 = pneg %p112
        $region62: #{analyzer_forward.1} parent=47 // pred_check_branch
          %331 = sbr.rel (%p329) target = $region64
        $region63: #{analyzer_forward.1} parent=47 // pred_region
          %332 = dma.done [#allocation10], 8192
        $region64: #{analyzer_forward.1} parent=47 // pred_fallthru
          _
        // Predicated region
        $region65: #{analyzer_forward.1} parent=47 // pred_check
          %p333 = pneg %p133
        $region66: #{analyzer_forward.1} parent=47 // pred_check_branch
          %335 = sbr.rel (%p333) target = $region68
        $region67: #{analyzer_forward.1} parent=47 // pred_region
          %336 = dma.done [#allocation10], 32
        $region68: #{analyzer_forward.1} parent=47 // pred_fallthru
          _
        // Predicated region
        $region69: #{analyzer_forward.1} parent=47 // pred_check
          %p337 = pneg %p154
        $region70: #{analyzer_forward.1} parent=47 // pred_check_branch
          %339 = sbr.rel (%p337) target = $region72
        $region71: #{analyzer_forward.1} parent=47 // pred_region
          %340 = dma.done [#allocation13], 4096
        $region72: #{analyzer_forward.1} parent=47 // pred_fallthru
          _
        %s341 = sand.u32 %s36, 1
        %s342 = scalar_lea.sflag [#allocation4], %s341
        %s343 = sand.u32 %s36, 1
        %s344 = smul.addr %s343, 32
        %s345 = scalar_lea.vmem [#allocation3], %s344
        %p346 = pneg %p49
        %p347 = pneg %p46
        %p348 = pneg %p70
        %p349 = pneg %p67
        %p350 = pneg %p91
        %p351 = pneg %p88
        %p352 = pneg %p112
        %p353 = pneg %p109
        %p354 = pneg %p133
        %p355 = pneg %p130
        %p356 = pneg %p154
        %p357 = pneg %p151
        %p358 = pneg %p175
        %p359 = pneg %p172
        %p360 = pneg %p201
        %p361 = pneg %p198
        %s362 = sand.u32 %s188, 1
        %s363 = scalar_lea.sflag [#allocation5], %s362
        %s364 = sand.u32 %s188, 1
        %s365 = smul.addr %s364, 32
        %s366 = scalar_lea.vmem [#allocation14], %s365
        %s367 = smul.u32 4, %s28
        %s368 = smul.u32 4, %s28
        %v369 = vld [vmem:[%s316] sm:$0xff]
        %v370 = vld [vmem:[%s316 + $0x8] sm:$0xff]
        %v371 = vld [vmem:[%s316 + $0x10] sm:$0xff]
        %v372 = vld [vmem:[%s316 + $0x18] sm:$0xff]
        %v373 = vld [vmem:[#allocation6] sm:$0xff]
        %v374 = vld [vmem:[#allocation6 + $0x8] sm:$0xff]
        %v375 = vld [vmem:[#allocation6 + $0x10] sm:$0xff]
        %v376 = vld [vmem:[#allocation6 + $0x18] sm:$0xff]
        %v377 = vld [vmem:[#allocation6 + $0x20] sm:$0xff]
        %v378 = vld [vmem:[#allocation6 + $0x28] sm:$0xff]
        %v379 = vld [vmem:[#allocation6 + $0x30] sm:$0xff]
        %v380 = vld [vmem:[#allocation6 + $0x38] sm:$0xff]
        %v381 = vld [vmem:[#allocation6 + $0x40] sm:$0xff]
        %v382 = vld [vmem:[#allocation6 + $0x48] sm:$0xff]
        %v383 = vld [vmem:[#allocation6 + $0x50] sm:$0xff]
        %v384 = vld [vmem:[#allocation6 + $0x58] sm:$0xff]
        %v385 = vld [vmem:[#allocation6 + $0x60] sm:$0xff]
        %v386 = vld [vmem:[#allocation6 + $0x68] sm:$0xff]
        %v387 = vld [vmem:[#allocation6 + $0x70] sm:$0xff]
        %v388 = vld [vmem:[#allocation6 + $0x78] sm:$0xff]
        %v389 = vld [vmem:[#allocation6 + $0x80] sm:$0xff]
        %v390 = vld [vmem:[#allocation6 + $0x88] sm:$0xff]
        %v391 = vld [vmem:[#allocation6 + $0x90] sm:$0xff]
        %v392 = vld [vmem:[#allocation6 + $0x98] sm:$0xff]
        %v393 = vld [vmem:[#allocation6 + $0xa0] sm:$0xff]
        %v394 = vld [vmem:[#allocation6 + $0xa8] sm:$0xff]
        %v395 = vld [vmem:[#allocation6 + $0xb0] sm:$0xff]
        %v396 = vld [vmem:[#allocation6 + $0xb8] sm:$0xff]
        %v397 = vld [vmem:[#allocation6 + $0xc0] sm:$0xff]
        %v398 = vld [vmem:[#allocation6 + $0xc8] sm:$0xff]
        %v399 = vld [vmem:[#allocation6 + $0xd0] sm:$0xff]
        %v400 = vld [vmem:[#allocation6 + $0xd8] sm:$0xff]
        %v401 = vld [vmem:[#allocation6 + $0xe0] sm:$0xff]
        %v402 = vld [vmem:[#allocation6 + $0xe8] sm:$0xff]
        %v403 = vld [vmem:[#allocation6 + $0xf0] sm:$0xff]
        %v404 = vld [vmem:[#allocation6 + $0xf8] sm:$0xff]
        %v405 = vld [vmem:[#allocation8] sm:$0x3]
        %v407 = vlaneseq
        %v408 = vshrl.u32 %v407, 7
        %v409 = vsub.s32 0, %v408
        %v410 = vrot.slane %v405, %v409
        %v411 = vlaneseq
        %v412 = vshrl.u32 %v411, 7
        %v413 = vsub.s32 1, %v412
        %v414 = vrot.slane %v405, %v413
        %417 = vmatprep.subr.mxu0 %v374
        %418 = vmatpush1.msra.mxu0 %v373
        %419 = vmatprep.subr.mxu0 %v376
        %420 = vmatpush1.msra.mxu0 %v375
        %421 = vmatprep.subr.mxu0 %v378
        %422 = vmatpush1.msra.mxu0 %v377
        %423 = vmatprep.subr.mxu0 %v380
        %424 = vmatpush1.msra.mxu0 %v379
        %425 = vmatprep.subr.mxu0 %v382
        %426 = vmatpush1.msra.mxu0 %v381
        %427 = vmatprep.subr.mxu0 %v384
        %428 = vmatpush1.msra.mxu0 %v383
        %429 = vmatprep.subr.mxu0 %v386
        %430 = vmatpush1.msra.mxu0 %v385
        %431 = vmatprep.subr.mxu0 %v388
        %432 = vmatpush1.msra.mxu0 %v387
        %433 = vmatprep.subr.mxu0 %v390
        %434 = vmatpush1.msra.mxu0 %v389
        %435 = vmatprep.subr.mxu0 %v392
        %436 = vmatpush1.msra.mxu0 %v391
        %437 = vmatprep.subr.mxu0 %v394
        %438 = vmatpush1.msra.mxu0 %v393
        %439 = vmatprep.subr.mxu0 %v396
        %440 = vmatpush1.msra.mxu0 %v395
        %441 = vmatprep.subr.mxu0 %v398
        %442 = vmatpush1.msra.mxu0 %v397
        %443 = vmatprep.subr.mxu0 %v400
        %444 = vmatpush1.msra.mxu0 %v399
        %445 = vmatprep.subr.mxu0 %v402
        %446 = vmatpush1.msra.mxu0 %v401
        %447 = vmatprep.subr.mxu0 %v404
        %448 = vmatpush1.msra.mxu0 %v403
        %449 = vmatprep.subr.mxu0 0.0
        %450 = vmatpush1.msra.mxu0 0.0
        %451 = vmatprep.subr.mxu0 0.0
        %452 = vmatpush1.msra.mxu0 0.0
        %453 = vmatprep.subr.mxu0 0.0
        %454 = vmatpush1.msra.mxu0 0.0
        %455 = vmatprep.subr.mxu0 0.0
        %456 = vmatpush1.msra.mxu0 0.0
        %457 = vmatprep.subr.mxu0 0.0
        %458 = vmatpush1.msra.mxu0 0.0
        %459 = vmatprep.subr.mxu0 0.0
        %460 = vmatpush1.msra.mxu0 0.0
        %461 = vmatprep.subr.mxu0 0.0
        %462 = vmatpush1.msra.mxu0 0.0
        %463 = vmatprep.subr.mxu0 0.0
        %464 = vmatpush1.msra.mxu0 0.0
        %465 = vmatprep.subr.mxu0 0.0
        %466 = vmatpush1.msra.mxu0 0.0
        %467 = vmatprep.subr.mxu0 0.0
        %468 = vmatpush1.msra.mxu0 0.0
        %469 = vmatprep.subr.mxu0 0.0
        %470 = vmatpush1.msra.mxu0 0.0
        %471 = vmatprep.subr.mxu0 0.0
        %472 = vmatpush1.msra.mxu0 0.0
        %473 = vmatprep.subr.mxu0 0.0
        %474 = vmatpush1.msra.mxu0 0.0
        %475 = vmatprep.subr.mxu0 0.0
        %476 = vmatpush1.msra.mxu0 0.0
        %477 = vmatprep.subr.mxu0 0.0
        %478 = vmatpush1.msra.mxu0 0.0
        %479 = vmatprep.subr.mxu0 0.0
        %480 = vmatpush1.msra.mxu0 0.0
        %481 = vmatprep.mubr.f32.mxu0 0.0
        %482 = vmatmul.mubr.f32.gmra.mrb[0].mxu0 %v369
        %v483 = vpop.f32.mrb[0].mxu0
        %v484 = vadd.f32 %v410, %v483
        %v485 = vpop.f32.mrb[0].mxu0
        %v486 = vadd.f32 %v414, %v485
        %487 = vmatprep.mubr.f32.mxu0 0.0
        %488 = vmatmul.mubr.f32.gmra.mrb[0].mxu0 %v370
        %v489 = vpop.f32.mrb[0].mxu0
        %v490 = vadd.f32 %v410, %v489
        %v491 = vpop.f32.mrb[0].mxu0
        %v492 = vadd.f32 %v414, %v491
        %493 = vmatprep.mubr.f32.mxu0 0.0
        %494 = vmatmul.mubr.f32.gmra.mrb[0].mxu0 %v371
        %v495 = vpop.f32.mrb[0].mxu0
        %v496 = vadd.f32 %v410, %v495
        %v497 = vpop.f32.mrb[0].mxu0
        %v498 = vadd.f32 %v414, %v497
        %499 = vmatprep.mubr.f32.mxu0 0.0
        %500 = vmatmul.mubr.f32.gmra.mrb[0].mxu0 %v372
        %v501 = vpop.f32.mrb[0].mxu0
        %v502 = vadd.f32 %v410, %v501
        %v503 = vpop.f32.mrb[0].mxu0
        %v504 = vadd.f32 %v414, %v503
        %505 = vdwg.mxu0
        %v506 = vmax.f32 %v484, 0.0
        %v507 = vmax.f32 %v486, 0.0
        %v508 = vmax.f32 %v490, 0.0
        %v509 = vmax.f32 %v492, 0.0
        %v510 = vmax.f32 %v496, 0.0
        %v511 = vmax.f32 %v498, 0.0
        %v512 = vmax.f32 %v502, 0.0
        %v513 = vmax.f32 %v504, 0.0
        %v514 = vld [vmem:[#allocation9] sm:$0xff]
        %v515 = vld [vmem:[#allocation9 + $0x8] sm:$0xff]
        %v516 = vld [vmem:[#allocation9 + $0x10] sm:$0xff]
        %v517 = vld [vmem:[#allocation9 + $0x18] sm:$0xff]
        %v518 = vld [vmem:[#allocation9 + $0x20] sm:$0xff]
        %v519 = vld [vmem:[#allocation9 + $0x28] sm:$0xff]
        %v520 = vld [vmem:[#allocation9 + $0x30] sm:$0xff]
        %v521 = vld [vmem:[#allocation9 + $0x38] sm:$0xff]
        %v522 = vld [vmem:[#allocation9 + $0x40] sm:$0xff]
        %v523 = vld [vmem:[#allocation9 + $0x48] sm:$0xff]
        %v524 = vld [vmem:[#allocation9 + $0x50] sm:$0xff]
        %v525 = vld [vmem:[#allocation9 + $0x58] sm:$0xff]
        %v526 = vld [vmem:[#allocation9 + $0x60] sm:$0xff]
        %v527 = vld [vmem:[#allocation9 + $0x68] sm:$0xff]
        %v528 = vld [vmem:[#allocation9 + $0x70] sm:$0xff]
        %v529 = vld [vmem:[#allocation9 + $0x78] sm:$0xff]
        %v530 = vld [vmem:[#allocation9 + $0x80] sm:$0xff]
        %v531 = vld [vmem:[#allocation9 + $0x88] sm:$0xff]
        %v532 = vld [vmem:[#allocation9 + $0x90] sm:$0xff]
        %v533 = vld [vmem:[#allocation9 + $0x98] sm:$0xff]
        %v534 = vld [vmem:[#allocation9 + $0xa0] sm:$0xff]
        %v535 = vld [vmem:[#allocation9 + $0xa8] sm:$0xff]
        %v536 = vld [vmem:[#allocation9 + $0xb0] sm:$0xff]
        %v537 = vld [vmem:[#allocation9 + $0xb8] sm:$0xff]
        %v538 = vld [vmem:[#allocation9 + $0xc0] sm:$0xff]
        %v539 = vld [vmem:[#allocation9 + $0xc8] sm:$0xff]
        %v540 = vld [vmem:[#allocation9 + $0xd0] sm:$0xff]
        %v541 = vld [vmem:[#allocation9 + $0xd8] sm:$0xff]
        %v542 = vld [vmem:[#allocation9 + $0xe0] sm:$0xff]
        %v543 = vld [vmem:[#allocation9 + $0xe8] sm:$0xff]
        %v544 = vld [vmem:[#allocation9 + $0xf0] sm:$0xff]
        %v545 = vld [vmem:[#allocation9 + $0xf8] sm:$0xff]
        %v546 = vld [vmem:[#allocation9 + $0x100] sm:$0xff]
        %v547 = vld [vmem:[#allocation9 + $0x108] sm:$0xff]
        %v548 = vld [vmem:[#allocation9 + $0x110] sm:$0xff]
        %v549 = vld [vmem:[#allocation9 + $0x118] sm:$0xff]
        %v550 = vld [vmem:[#allocation9 + $0x120] sm:$0xff]
        %v551 = vld [vmem:[#allocation9 + $0x128] sm:$0xff]
        %v552 = vld [vmem:[#allocation9 + $0x130] sm:$0xff]
        %v553 = vld [vmem:[#allocation9 + $0x138] sm:$0xff]
        %v554 = vld [vmem:[#allocation9 + $0x140] sm:$0xff]
        %v555 = vld [vmem:[#allocation9 + $0x148] sm:$0xff]
        %v556 = vld [vmem:[#allocation9 + $0x150] sm:$0xff]
        %v557 = vld [vmem:[#allocation9 + $0x158] sm:$0xff]
        %v558 = vld [vmem:[#allocation9 + $0x160] sm:$0xff]
        %v559 = vld [vmem:[#allocation9 + $0x168] sm:$0xff]
        %v560 = vld [vmem:[#allocation9 + $0x170] sm:$0xff]
        %v561 = vld [vmem:[#allocation9 + $0x178] sm:$0xff]
        %v562 = vld [vmem:[#allocation9 + $0x180] sm:$0xff]
        %v563 = vld [vmem:[#allocation9 + $0x188] sm:$0xff]
        %v564 = vld [vmem:[#allocation9 + $0x190] sm:$0xff]
        %v565 = vld [vmem:[#allocation9 + $0x198] sm:$0xff]
        %v566 = vld [vmem:[#allocation9 + $0x1a0] sm:$0xff]
        %v567 = vld [vmem:[#allocation9 + $0x1a8] sm:$0xff]
        %v568 = vld [vmem:[#allocation9 + $0x1b0] sm:$0xff]
        %v569 = vld [vmem:[#allocation9 + $0x1b8] sm:$0xff]
        %v570 = vld [vmem:[#allocation9 + $0x1c0] sm:$0xff]
        %v571 = vld [vmem:[#allocation9 + $0x1c8] sm:$0xff]
        %v572 = vld [vmem:[#allocation9 + $0x1d0] sm:$0xff]
        %v573 = vld [vmem:[#allocation9 + $0x1d8] sm:$0xff]
        %v574 = vld [vmem:[#allocation9 + $0x1e0] sm:$0xff]
        %v575 = vld [vmem:[#allocation9 + $0x1e8] sm:$0xff]
        %v576 = vld [vmem:[#allocation9 + $0x1f0] sm:$0xff]
        %v577 = vld [vmem:[#allocation9 + $0x1f8] sm:$0xff]
        %v578 = vld [vmem:[#allocation11] sm:$0x3]
        %v580 = vlaneseq
        %v581 = vshrl.u32 %v580, 7
        %v582 = vsub.s32 0, %v581
        %v583 = vrot.slane %v578, %v582
        %v584 = vlaneseq
        %v585 = vshrl.u32 %v584, 7
        %v586 = vsub.s32 1, %v585
        %v587 = vrot.slane %v578, %v586
        %590 = vmatprep.subr.mxu0 %v515
        %591 = vmatpush1.msra.mxu0 %v514
        %592 = vmatprep.subr.mxu0 %v517
        %593 = vmatpush1.msra.mxu0 %v516
        %594 = vmatprep.subr.mxu0 %v519
        %595 = vmatpush1.msra.mxu0 %v518
        %596 = vmatprep.subr.mxu0 %v521
        %597 = vmatpush1.msra.mxu0 %v520
        %598 = vmatprep.subr.mxu0 %v523
        %599 = vmatpush1.msra.mxu0 %v522
        %600 = vmatprep.subr.mxu0 %v525
        %601 = vmatpush1.msra.mxu0 %v524
        %602 = vmatprep.subr.mxu0 %v527
        %603 = vmatpush1.msra.mxu0 %v526
        %604 = vmatprep.subr.mxu0 %v529
        %605 = vmatpush1.msra.mxu0 %v528
        %606 = vmatprep.subr.mxu0 %v531
        %607 = vmatpush1.msra.mxu0 %v530
        %608 = vmatprep.subr.mxu0 %v533
        %609 = vmatpush1.msra.mxu0 %v532
        %610 = vmatprep.subr.mxu0 %v535
        %611 = vmatpush1.msra.mxu0 %v534
        %612 = vmatprep.subr.mxu0 %v537
        %613 = vmatpush1.msra.mxu0 %v536
        %614 = vmatprep.subr.mxu0 %v539
        %615 = vmatpush1.msra.mxu0 %v538
        %616 = vmatprep.subr.mxu0 %v541
        %617 = vmatpush1.msra.mxu0 %v540
        %618 = vmatprep.subr.mxu0 %v543
        %619 = vmatpush1.msra.mxu0 %v542
        %620 = vmatprep.subr.mxu0 %v545
        %621 = vmatpush1.msra.mxu0 %v544
        %622 = vmatprep.subr.mxu0 %v547
        %623 = vmatpush1.msra.mxu0 %v546
        %624 = vmatprep.subr.mxu0 %v549
        %625 = vmatpush1.msra.mxu0 %v548
        %626 = vmatprep.subr.mxu0 %v551
        %627 = vmatpush1.msra.mxu0 %v550
        %628 = vmatprep.subr.mxu0 %v553
        %629 = vmatpush1.msra.mxu0 %v552
        %630 = vmatprep.subr.mxu0 %v555
        %631 = vmatpush1.msra.mxu0 %v554
        %632 = vmatprep.subr.mxu0 %v557
        %633 = vmatpush1.msra.mxu0 %v556
        %634 = vmatprep.subr.mxu0 %v559
        %635 = vmatpush1.msra.mxu0 %v558
        %636 = vmatprep.subr.mxu0 %v561
        %637 = vmatpush1.msra.mxu0 %v560
        %638 = vmatprep.subr.mxu0 %v563
        %639 = vmatpush1.msra.mxu0 %v562
        %640 = vmatprep.subr.mxu0 %v565
        %641 = vmatpush1.msra.mxu0 %v564
        %642 = vmatprep.subr.mxu0 %v567
        %643 = vmatpush1.msra.mxu0 %v566
        %644 = vmatprep.subr.mxu0 %v569
        %645 = vmatpush1.msra.mxu0 %v568
        %646 = vmatprep.subr.mxu0 %v571
        %647 = vmatpush1.msra.mxu0 %v570
        %648 = vmatprep.subr.mxu0 %v573
        %649 = vmatpush1.msra.mxu0 %v572
        %650 = vmatprep.subr.mxu0 %v575
        %651 = vmatpush1.msra.mxu0 %v574
        %652 = vmatprep.subr.mxu0 %v577
        %653 = vmatpush1.msra.mxu0 %v576
        %654 = vmatprep.mubr.f32.mxu0 %v507
        %655 = vmatmul.mubr.f32.gmra.mrb[0].mxu0 %v506
        %v656 = vpop.f32.mrb[0].mxu0
        %v657 = vadd.f32 %v583, %v656
        %v658 = vpop.f32.mrb[0].mxu0
        %v659 = vadd.f32 %v587, %v658
        %660 = vmatprep.mubr.f32.mxu0 %v509
        %661 = vmatmul.mubr.f32.gmra.mrb[0].mxu0 %v508
        %v662 = vpop.f32.mrb[0].mxu0
        %v663 = vadd.f32 %v583, %v662
        %v664 = vpop.f32.mrb[0].mxu0
        %v665 = vadd.f32 %v587, %v664
        %666 = vmatprep.mubr.f32.mxu0 %v511
        %667 = vmatmul.mubr.f32.gmra.mrb[0].mxu0 %v510
        %v668 = vpop.f32.mrb[0].mxu0
        %v669 = vadd.f32 %v583, %v668
        %v670 = vpop.f32.mrb[0].mxu0
        %v671 = vadd.f32 %v587, %v670
        %672 = vmatprep.mubr.f32.mxu0 %v513
        %673 = vmatmul.mubr.f32.gmra.mrb[0].mxu0 %v512
        %v674 = vpop.f32.mrb[0].mxu0
        %v675 = vadd.f32 %v583, %v674
        %v676 = vpop.f32.mrb[0].mxu0
        %v677 = vadd.f32 %v587, %v676
        %678 = vdwg.mxu0
        %v679 = vmax.f32 %v657, 0.0
        %v680 = vmax.f32 %v659, 0.0
        %v681 = vmax.f32 %v663, 0.0
        %v682 = vmax.f32 %v665, 0.0
        %v683 = vmax.f32 %v669, 0.0
        %v684 = vmax.f32 %v671, 0.0
        %v685 = vmax.f32 %v675, 0.0
        %v686 = vmax.f32 %v677, 0.0
        %v687 = vld [vmem:[#allocation12] sm:$0xff]
        %v688 = vld [vmem:[#allocation12 + $0x8] sm:$0xff]
        %v689 = vld [vmem:[#allocation12 + $0x10] sm:$0xff]
        %v690 = vld [vmem:[#allocation12 + $0x18] sm:$0xff]
        %v691 = vld [vmem:[#allocation12 + $0x20] sm:$0xff]
        %v692 = vld [vmem:[#allocation12 + $0x28] sm:$0xff]
        %v693 = vld [vmem:[#allocation12 + $0x30] sm:$0xff]
        %v694 = vld [vmem:[#allocation12 + $0x38] sm:$0xff]
        %v695 = vld [vmem:[#allocation12 + $0x40] sm:$0xff]
        %v696 = vld [vmem:[#allocation12 + $0x48] sm:$0xff]
        %v697 = vld [vmem:[#allocation12 + $0x50] sm:$0xff]
        %v698 = vld [vmem:[#allocation12 + $0x58] sm:$0xff]
        %v699 = vld [vmem:[#allocation12 + $0x60] sm:$0xff]
        %v700 = vld [vmem:[#allocation12 + $0x68] sm:$0xff]
        %v701 = vld [vmem:[#allocation12 + $0x70] sm:$0xff]
        %v702 = vld [vmem:[#allocation12 + $0x78] sm:$0xff]
        %v703 = vld [vmem:[#allocation12 + $0x80] sm:$0xff]
        %v704 = vld [vmem:[#allocation12 + $0x88] sm:$0xff]
        %v705 = vld [vmem:[#allocation12 + $0x90] sm:$0xff]
        %v706 = vld [vmem:[#allocation12 + $0x98] sm:$0xff]
        %v707 = vld [vmem:[#allocation12 + $0xa0] sm:$0xff]
        %v708 = vld [vmem:[#allocation12 + $0xa8] sm:$0xff]
        %v709 = vld [vmem:[#allocation12 + $0xb0] sm:$0xff]
        %v710 = vld [vmem:[#allocation12 + $0xb8] sm:$0xff]
        %v711 = vld [vmem:[#allocation12 + $0xc0] sm:$0xff]
        %v712 = vld [vmem:[#allocation12 + $0xc8] sm:$0xff]
        %v713 = vld [vmem:[#allocation12 + $0xd0] sm:$0xff]
        %v714 = vld [vmem:[#allocation12 + $0xd8] sm:$0xff]
        %v715 = vld [vmem:[#allocation12 + $0xe0] sm:$0xff]
        %v716 = vld [vmem:[#allocation12 + $0xe8] sm:$0xff]
        %v717 = vld [vmem:[#allocation12 + $0xf0] sm:$0xff]
        %v718 = vld [vmem:[#allocation12 + $0xf8] sm:$0xff]
        %s719 = sld [smem:[#allocation2]]
        %v720 = vstv %s719
        %721 = vmatprep.subr.mxu0 0.0
        %722 = vmatpush1.msra.mxu0 %v687
        %723 = vmatprep.subr.mxu0 0.0
        %724 = vmatpush1.msra.mxu0 %v688
        %725 = vmatprep.subr.mxu0 0.0
        %726 = vmatpush1.msra.mxu0 %v689
        %727 = vmatprep.subr.mxu0 0.0
        %728 = vmatpush1.msra.mxu0 %v690
        %729 = vmatprep.subr.mxu0 0.0
        %730 = vmatpush1.msra.mxu0 %v691
        %731 = vmatprep.subr.mxu0 0.0
        %732 = vmatpush1.msra.mxu0 %v692
        %733 = vmatprep.subr.mxu0 0.0
        %734 = vmatpush1.msra.mxu0 %v693
        %735 = vmatprep.subr.mxu0 0.0
        %736 = vmatpush1.msra.mxu0 %v694
        %737 = vmatprep.subr.mxu0 0.0
        %738 = vmatpush1.msra.mxu0 %v695
        %739 = vmatprep.subr.mxu0 0.0
        %740 = vmatpush1.msra.mxu0 %v696
        %741 = vmatprep.subr.mxu0 0.0
        %742 = vmatpush1.msra.mxu0 %v697
        %743 = vmatprep.subr.mxu0 0.0
        %744 = vmatpush1.msra.mxu0 %v698
        %745 = vmatprep.subr.mxu0 0.0
        %746 = vmatpush1.msra.mxu0 %v699
        %747 = vmatprep.subr.mxu0 0.0
        %748 = vmatpush1.msra.mxu0 %v700
        %749 = vmatprep.subr.mxu0 0.0
        %750 = vmatpush1.msra.mxu0 %v701
        %751 = vmatprep.subr.mxu0 0.0
        %752 = vmatpush1.msra.mxu0 %v702
        %753 = vmatprep.subr.mxu0 0.0
        %754 = vmatpush1.msra.mxu0 %v703
        %755 = vmatprep.subr.mxu0 0.0
        %756 = vmatpush1.msra.mxu0 %v704
        %757 = vmatprep.subr.mxu0 0.0
        %758 = vmatpush1.msra.mxu0 %v705
        %759 = vmatprep.subr.mxu0 0.0
        %760 = vmatpush1.msra.mxu0 %v706
        %761 = vmatprep.subr.mxu0 0.0
        %762 = vmatpush1.msra.mxu0 %v707
        %763 = vmatprep.subr.mxu0 0.0
        %764 = vmatpush1.msra.mxu0 %v708
        %765 = vmatprep.subr.mxu0 0.0
        %766 = vmatpush1.msra.mxu0 %v709
        %767 = vmatprep.subr.mxu0 0.0
        %768 = vmatpush1.msra.mxu0 %v710
        %769 = vmatprep.subr.mxu0 0.0
        %770 = vmatpush1.msra.mxu0 %v711
        %771 = vmatprep.subr.mxu0 0.0
        %772 = vmatpush1.msra.mxu0 %v712
        %773 = vmatprep.subr.mxu0 0.0
        %774 = vmatpush1.msra.mxu0 %v713
        %775 = vmatprep.subr.mxu0 0.0
        %776 = vmatpush1.msra.mxu0 %v714
        %777 = vmatprep.subr.mxu0 0.0
        %778 = vmatpush1.msra.mxu0 %v715
        %779 = vmatprep.subr.mxu0 0.0
        %780 = vmatpush1.msra.mxu0 %v716
        %781 = vmatprep.subr.mxu0 0.0
        %782 = vmatpush1.msra.mxu0 %v717
        %783 = vmatprep.subr.mxu0 0.0
        %784 = vmatpush1.msra.mxu0 %v718
        %785 = vmatprep.mubr.f32.mxu0 %v680
        %786 = vmatmul.mubr.f32.gmra.mrb[0].mxu0 %v679
        %v787 = vpop.f32.mrb[0].mxu0
        %v788 = vadd.f32 %v720, %v787
        %v789 = vpop.f32.mrb[0].mxu0
        %790 = vmatprep.mubr.f32.mxu0 %v682
        %791 = vmatmul.mubr.f32.gmra.mrb[0].mxu0 %v681
        %v792 = vpop.f32.mrb[0].mxu0
        %v793 = vadd.f32 %v720, %v792
        %v794 = vpop.f32.mrb[0].mxu0
        %795 = vmatprep.mubr.f32.mxu0 %v684
        %796 = vmatmul.mubr.f32.gmra.mrb[0].mxu0 %v683
        %v797 = vpop.f32.mrb[0].mxu0
        %v798 = vadd.f32 %v720, %v797
        %v799 = vpop.f32.mrb[0].mxu0
        %800 = vmatprep.mubr.f32.mxu0 %v686
        %801 = vmatmul.mubr.f32.gmra.mrb[0].mxu0 %v685
        %v802 = vpop.f32.mrb[0].mxu0
        %v803 = vadd.f32 %v720, %v802
        %v804 = vpop.f32.mrb[0].mxu0
        %805 = vdwg.mxu0
        %v806 = vsub.f32 0.0, %v788
        %v807 = vsub.f32 0.0, %v793
        %v808 = vsub.f32 0.0, %v798
        %v809 = vsub.f32 0.0, %v803
        %v810 = vmul.f32 %v806, 1.442695
        %v811 = vpow.pop %v810
        %v812 = vmul.f32 %v807, 1.442695
        %v813 = vpow.pop %v812
        %v814 = vmul.f32 %v808, 1.442695
        %v815 = vpow.pop %v814
        %v816 = vmul.f32 %v809, 1.442695
        %v817 = vpow.pop %v816
        %v818 = vadd.f32 %v811, 1.0
        %v819 = vadd.f32 %v813, 1.0
        %v820 = vadd.f32 %v815, 1.0
        %v821 = vadd.f32 %v817, 1.0
        %v822 = vrcp.pop %v818
        %v823 = vmul.f32 1.0, %v822
        %v824 = vrcp.pop %v819
        %v825 = vmul.f32 1.0, %v824
        %v826 = vrcp.pop %v820
        %v827 = vmul.f32 1.0, %v826
        %v828 = vrcp.pop %v821
        %v829 = vmul.f32 1.0, %v828
        %vm830 = vcmask 64512
        %831 = vst.msk [vmem:[%s366] sm:$0xff] %vm830, %v823
        %832 = vst.msk [vmem:[%s366 + $0x8] sm:$0xff] %vm830, %v825
        %833 = vst.msk [vmem:[%s366 + $0x10] sm:$0xff] %vm830, %v827
        %834 = vst.msk [vmem:[%s366 + $0x18] sm:$0xff] %vm830, %v829
        %s835 = sand.u32 %s188, 1
        %s836 = scalar_lea.sflag [#allocation5], %s835
        %s837 = sand.u32 %s188, 1
        %s838 = smul.addr %s837, 32
        %s839 = scalar_lea.vmem [#allocation14], %s838
        // Predicated region
        $region73: #{analyzer_forward.1} parent=47 // pred_check
          %p840 = pneg %p198
        $region74: #{analyzer_forward.1} parent=47 // pred_check_branch
          %842 = sbr.rel (%p840) target = $region76
        $region75: #{analyzer_forward.1} parent=47 // pred_region
          %s843 = smul.u32 4, %s28
          %s845 = ssub.s32 512, 512
          %846 = vsyncadd %s836, %s845
          %s847 = smul.addr %s843, 128
          %s848 = scalar_lea.hbm %s7, %s847
          %s849 = sshll.u32 %s839, 4
          %s850 = int_to_ptr.vmem [resolvable:$true] %s849
          %855 = dma.vmem_to_hbm [thread:$0]  %s850, 512, %s848, %s836, 128, 128, 8
        $region76: #{analyzer_forward.1} parent=47 // pred_fallthru
          _
      $region48: #{analyzer_forward.1} parent=5 // pred_fallthru
        _
      %p856 = scmp.le.s32.totalorder 2, %s23
      // Predicated region
      $region77: #{analyzer_forward.1} parent=5 // pred_check
        %p857 = pneg %p856
      $region78: #{analyzer_forward.1} parent=5 // pred_check_branch
        %859 = sbr.rel (%p857) target = $region80
      $region79: #{analyzer_forward.1} parent=5 // pred_region
        %s860 = ssub.s32 %s23, 2
        // Predicated region
        $region81: #{analyzer_forward.1} parent=79 // pred_check
          %p861 = pneg %p204
        $region82: #{analyzer_forward.1} parent=79 // pred_check_branch
          %863 = sbr.rel (%p861) target = $region84
        $region83: #{analyzer_forward.1} parent=79 // pred_region
          %s864 = sand.u32 %s189, 1
          %s865 = scalar_lea.sflag [#allocation5], %s864
          %s866 = sand.u32 %s189, 1
          %s867 = smul.addr %s866, 32
          %s868 = scalar_lea.vmem [#allocation14], %s867
          %869 = dma.done %s865, 512
        $region84: #{analyzer_forward.1} parent=79 // pred_fallthru
          _
      $region80: #{analyzer_forward.1} parent=5 // pred_fallthru
        _
    $region6: #{analyzer_forward.1} parent=1 // loop_footer
      %s27 = sadd.s32 1, %s23
    $region7: #{analyzer_forward.1} parent=1 // loop_footer_branch
      %22 = sbr.rel target = $region3
    $region8: #{analyzer_forward.1} parent=1 // loop_exit
      _
    %870 = vsyncpa [#allocation4], 1
    %s871 = scalar_lea.sflag [#allocation4], 1
    %872 = vsyncpa %s871, 1
    %873 = vsyncpa [#allocation7], 1
    %874 = vsyncpa [#allocation10], 1
    %875 = vsyncpa [#allocation13], 1
    %876 = vsyncpa [#allocation5], 1
    %s877 = scalar_lea.sflag [#allocation5], 1
    %878 = vsyncpa %s877, 1

</llo_original>
